<compile_context>
chip_gen: v5e
topology: v5e:2x2
jax: 0.10.0
libtpu: 0.0.40
codegen_flags: <defaults>
</compile_context>

<pallas_src>
import numpy as np
import jax
import jax.numpy as jnp
from jax.experimental import pallas as pl
from jax.experimental.pallas import tpu as pltpu

# Model dimensions (the PyTorch module references these as globals).
INPUT_NODES = 16
HIDDEN_NODES = 32
OUTPUT_NODES = 8


def _cdiv(a, b):
    return -(-a // b)


def _round_up(n, m):
    return _cdiv(n, m) * m


def _sublane(dtype):
    # Rows packed per sublane group: f32 -> 8, bf16 -> 16, int8/fp8 -> 32.
    return max(8, 32 // np.dtype(dtype).itemsize)


def mlp_kernel(x_ref, w1_ref, b1_ref, w2_ref, b2_ref, w3_ref, b3_ref, o_ref):
    x = x_ref[...]
    # fc1 + relu: MXU matmul with f32 accumulation; bias/relu in f32 (VPU).
    h1 = jnp.dot(x, w1_ref[...], preferred_element_type=jnp.float32) + b1_ref[...]
    h1 = jnp.maximum(h1, 0.0)
    # fc2 + tanh: cast MXU inputs to the weight dtype, keep f32 elementwise.
    h2 = jnp.dot(h1.astype(w2_ref.dtype), w2_ref[...],
                 preferred_element_type=jnp.float32) + b2_ref[...]
    h2 = jnp.tanh(h2)
    # fc3
    out = jnp.dot(h2.astype(w3_ref.dtype), w3_ref[...],
                  preferred_element_type=jnp.float32) + b3_ref[...]
    o_ref[...] = out.astype(o_ref.dtype)


def mlp_forward(x, w1, b1, w2, b2, w3, b3, *,
                block_batch=32768, param_dtype=jnp.float32):
    """x: [B, in] f32.  Weights are [in, out]; biases are [1, out].

    Tiles the batch over a 1-D grid (pipelined x/out DMA), keeps the tiny
    weights/biases VMEM-resident via constant index_maps, and never pads the
    feature dims of x / out in HBM.  `param_dtype=jnp.bfloat16` halves the
    dominant x-read traffic (MXU inputs only; accumulation stays f32).
    """
    B, d_in = x.shape
    d_hid = w1.shape[1]
    d_out = w3.shape[1]

    # Batch tiling: dtype-aware sublane rounding, tile size balanced across
    # grid steps to minimize zero-padded rows.  Small batches collapse to a
    # single grid step (small-batch fast path).
    sub = _sublane(param_dtype)
    b_r = _round_up(B, sub)
    tm_cap = max(sub, _round_up(min(block_batch, b_r), sub))
    n_steps = _cdiv(b_r, tm_cap)
    tm = _round_up(_cdiv(b_r, n_steps), sub)
    b_pad = n_steps * tm

    # Only the batch dim is padded (zero rows are sliced off at the end).
    xp = jnp.pad(x, ((0, b_pad - B), (0, 0))).astype(param_dtype)
    w1c = w1.astype(param_dtype)
    w2c = w2.astype(param_dtype)
    w3c = w3.astype(param_dtype)
    # Biases stay f32: added to the f32 accumulator inside the kernel.
    b1f = b1.astype(jnp.float32)
    b2f = b2.astype(jnp.float32)
    b3f = b3.astype(jnp.float32)

    # x / out march along the batch grid axis; params use constant index_maps
    # so they are DMA'd once and stay resident in VMEM.
    x_spec = pl.BlockSpec((tm, d_in), lambda i: (i, 0))
    out_spec = pl.BlockSpec((tm, d_out), lambda i: (i, 0))

    def const_spec(shape):
        return pl.BlockSpec(shape, lambda i: (0, 0))

    itemsize = np.dtype(param_dtype).itemsize
    param_bytes = (w1c.size + w2c.size + w3c.size) * itemsize \
        + (b1f.size + b2f.size + b3f.size) * 4
    cost = pl.CostEstimate(
        flops=2 * b_pad * (d_in * d_hid + d_hid * d_hid + d_hid * d_out),
        transcendentals=b_pad * d_hid,
        bytes_accessed=b_pad * d_in * itemsize + b_pad * d_out * 4 + param_bytes,
    )

    out_padded = pl.pallas_call(
        mlp_kernel,
        out_shape=jax.ShapeDtypeStruct((b_pad, d_out), jnp.float32),
        grid=(n_steps,),
        in_specs=[
            x_spec,
            const_spec(w1c.shape), const_spec(b1f.shape),
            const_spec(w2c.shape), const_spec(b2f.shape),
            const_spec(w3c.shape), const_spec(b3f.shape),
        ],
        out_specs=out_spec,
        compiler_params=pltpu.CompilerParams(
            # Batch axis shards across both TensorCores on v7x.
            dimension_semantics=("parallel",),
            # Large batch tiles exceed v5e's 16 MiB scoped-VMEM default;
            # 48 MiB keeps headroom below v7x's 64 MiB physical VMEM.
            vmem_limit_bytes=48 * 1024 * 1024,
        ),
        cost_estimate=cost,
    )(xp, w1c, b1f, w2c, b2f, w3c, b3f)

    # TODO(synk): if xprof ever shows the 8-wide masked output stores binding,
    # present the output lane-dense via a wrapper-side reshape instead; DMA
    # bytes dominate today so it is left as-is.
    return out_padded[:B, :]


def init_linear(key, fan_in, fan_out):
    """Deterministic init mimicking PyTorch nn.Linear defaults: U(-1/sqrt(in), 1/sqrt(in))."""
    kw, kb = jax.random.split(key)
    bound = 1.0 / jnp.sqrt(jnp.float32(fan_in))
    w = jax.random.uniform(kw, (fan_in, fan_out), jnp.float32, -bound, bound)  # stored [in, out]
    b = jax.random.uniform(kb, (1, fan_out), jnp.float32, -bound, bound)
    return w, b


if __name__ == "__main__":
    BATCH = 512  # small demo batch; wrapper tiles/pads any batch size

    key = jax.random.PRNGKey(0)
    kx, k1, k2, k3 = jax.random.split(key, 4)

    x = jax.random.normal(kx, (BATCH, INPUT_NODES), jnp.float32)
    w1, b1 = init_linear(k1, INPUT_NODES, HIDDEN_NODES)
    w2, b2 = init_linear(k2, HIDDEN_NODES, HIDDEN_NODES)
    w3, b3 = init_linear(k3, HIDDEN_NODES, OUTPUT_NODES)

    # Pure-JAX reference (same semantics as the PyTorch module).
    ref = jnp.tanh(jnp.maximum(x @ w1 + b1, 0.0) @ w2 + b2) @ w3 + b3

    # 1) Default path: whole batch fits one tile -> grid=(1,) fast path, f32.
    out = mlp_forward(x, w1, b1, w2, b2, w3, b3)
    jax.block_until_ready(out)
    assert out.shape == (BATCH, OUTPUT_NODES)
    assert jnp.allclose(out, ref, atol=1e-5, rtol=1e-5)

    # 2) Forced multi-step grid (exercises the pipelined batch tiling), f32.
    out_tiled = mlp_forward(x, w1, b1, w2, b2, w3, b3, block_batch=128)
    jax.block_until_ready(out_tiled)
    assert jnp.allclose(out_tiled, ref, atol=1e-5, rtol=1e-5)

    # 3) bf16 MXU inputs (halves HBM read traffic); f32 accumulation keeps the
    #    result within bf16 rounding of the f32 reference.
    out_bf16 = mlp_forward(x, w1, b1, w2, b2, w3, b3, block_batch=128,
                           param_dtype=jnp.bfloat16)
    jax.block_until_ready(out_bf16)
    assert jnp.allclose(out_bf16, ref, atol=5e-2, rtol=5e-2)

    print("KERNEL_OK")
</pallas_src>

<mosaic_0001>
module attributes {stable_mosaic.version = 11 : i64} {
  func.func @mlp_kernel(%arg0: i32, %arg1: memref<512x16xf32, #tpu.memory_space<vmem>>, %arg2: memref<16x32xf32, #tpu.memory_space<vmem>>, %arg3: memref<1x32xf32, #tpu.memory_space<vmem>>, %arg4: memref<32x32xf32, #tpu.memory_space<vmem>>, %arg5: memref<1x32xf32, #tpu.memory_space<vmem>>, %arg6: memref<32x8xf32, #tpu.memory_space<vmem>>, %arg7: memref<1x8xf32, #tpu.memory_space<vmem>>, %arg8: memref<512x8xf32, #tpu.memory_space<vmem>>) attributes {dimension_semantics = [#tpu.dimension_semantics<parallel>], iteration_bounds = array<i64: 1>, scalar_prefetch = 0 : i64, scratch_operands = 0 : i64, tpu.core_type = #tpu.core_type<tc>, window_params = [{transform_indices = @transform_0, window_bounds = array<i64: 512, 16>}, {pipeline_mode = #tpu.pipeline_mode<synchronous>, transform_indices = @transform_1, window_bounds = array<i64: 16, 32>}, {pipeline_mode = #tpu.pipeline_mode<synchronous>, transform_indices = @transform_2, window_bounds = array<i64: 1, 32>}, {pipeline_mode = #tpu.pipeline_mode<synchronous>, transform_indices = @transform_3, window_bounds = array<i64: 32, 32>}, {pipeline_mode = #tpu.pipeline_mode<synchronous>, transform_indices = @transform_4, window_bounds = array<i64: 1, 32>}, {pipeline_mode = #tpu.pipeline_mode<synchronous>, transform_indices = @transform_5, window_bounds = array<i64: 32, 8>}, {pipeline_mode = #tpu.pipeline_mode<synchronous>, transform_indices = @transform_6, window_bounds = array<i64: 1, 8>}, {transform_indices = @transform_7, window_bounds = array<i64: 512, 8>}]} {
    %c0 = arith.constant 0 : index
    %c0_0 = arith.constant 0 : index
    %0 = vector.load %arg1[%c0, %c0_0] : memref<512x16xf32, #tpu.memory_space<vmem>>, vector<512x16xf32>
    %c0_1 = arith.constant 0 : index
    %c0_2 = arith.constant 0 : index
    %1 = vector.load %arg2[%c0_1, %c0_2] : memref<16x32xf32, #tpu.memory_space<vmem>>, vector<16x32xf32>
    %cst = arith.constant dense<0.000000e+00> : vector<512x32xf32>
    %2 = tpu.matmul %0, %1, %cst {dimension_numbers = #tpu.dot_dimension_numbers<[1], [0], [0], [1], [0, 0, 1, 1], [], []>} : vector<512x16xf32>, vector<16x32xf32>, vector<512x32xf32> -> vector<512x32xf32>
    %c0_3 = arith.constant 0 : index
    %c0_4 = arith.constant 0 : index
    %3 = vector.load %arg3[%c0_3, %c0_4] : memref<1x32xf32, #tpu.memory_space<vmem>>, vector<1x32xf32>
    %4 = vector.broadcast %3 : vector<1x32xf32> to vector<512x32xf32>
    %5 = arith.addf %2, %4 : vector<512x32xf32>
    %cst_5 = arith.constant 0.000000e+00 : f32
    %6 = vector.broadcast %cst_5 : f32 to vector<512x32xf32>
    %7 = arith.maximumf %5, %6 : vector<512x32xf32>
    %c0_6 = arith.constant 0 : index
    %c0_7 = arith.constant 0 : index
    %8 = vector.load %arg4[%c0_6, %c0_7] : memref<32x32xf32, #tpu.memory_space<vmem>>, vector<32x32xf32>
    %cst_8 = arith.constant dense<0.000000e+00> : vector<512x32xf32>
    %9 = tpu.matmul %7, %8, %cst_8 {dimension_numbers = #tpu.dot_dimension_numbers<[1], [0], [0], [1], [0, 0, 1, 1], [], []>} : vector<512x32xf32>, vector<32x32xf32>, vector<512x32xf32> -> vector<512x32xf32>
    %c0_9 = arith.constant 0 : index
    %c0_10 = arith.constant 0 : index
    %10 = vector.load %arg5[%c0_9, %c0_10] : memref<1x32xf32, #tpu.memory_space<vmem>>, vector<1x32xf32>
    %11 = vector.broadcast %10 : vector<1x32xf32> to vector<512x32xf32>
    %12 = arith.addf %9, %11 : vector<512x32xf32>
    %13 = math.tanh %12 : vector<512x32xf32>
    %c0_11 = arith.constant 0 : index
    %c0_12 = arith.constant 0 : index
    %14 = vector.load %arg6[%c0_11, %c0_12] : memref<32x8xf32, #tpu.memory_space<vmem>>, vector<32x8xf32>
    %cst_13 = arith.constant dense<0.000000e+00> : vector<512x8xf32>
    %15 = tpu.matmul %13, %14, %cst_13 {dimension_numbers = #tpu.dot_dimension_numbers<[1], [0], [0], [1], [0, 0, 1, 1], [], []>} : vector<512x32xf32>, vector<32x8xf32>, vector<512x8xf32> -> vector<512x8xf32>
    %c0_14 = arith.constant 0 : index
    %c0_15 = arith.constant 0 : index
    %16 = vector.load %arg7[%c0_14, %c0_15] : memref<1x8xf32, #tpu.memory_space<vmem>>, vector<1x8xf32>
    %17 = vector.broadcast %16 : vector<1x8xf32> to vector<512x8xf32>
    %18 = arith.addf %15, %17 : vector<512x8xf32>
    %c0_16 = arith.constant 0 : index
    %c0_17 = arith.constant 0 : index
    %19 = vector.load %arg8[%c0_16, %c0_17] : memref<512x8xf32, #tpu.memory_space<vmem>>, vector<512x8xf32>
    tpu.vector_store %arg8[%c0_16, %c0_17], %18 {strides = array<i32>} : memref<512x8xf32, #tpu.memory_space<vmem>>, vector<512x8xf32>,
    return
  }
  func.func @transform_0(%arg0: i32) -> (i32, i32) {
    %c0_i32 = arith.constant 0 : i32
    %c0_i32_0 = arith.constant 0 : i32
    return %arg0, %c0_i32 : i32, i32
  }
  func.func @transform_1(%arg0: i32) -> (i32, i32) {
    %c0_i32 = arith.constant 0 : i32
    %c0_i32_0 = arith.constant 0 : i32
    %c0_i32_1 = arith.constant 0 : i32
    return %c0_i32, %c0_i32_0 : i32, i32
  }
  func.func @transform_2(%arg0: i32) -> (i32, i32) {
    %c0_i32 = arith.constant 0 : i32
    %c0_i32_0 = arith.constant 0 : i32
    %c0_i32_1 = arith.constant 0 : i32
    return %c0_i32, %c0_i32_0 : i32, i32
  }
  func.func @transform_3(%arg0: i32) -> (i32, i32) {
    %c0_i32 = arith.constant 0 : i32
    %c0_i32_0 = arith.constant 0 : i32
    %c0_i32_1 = arith.constant 0 : i32
    return %c0_i32, %c0_i32_0 : i32, i32
  }
  func.func @transform_4(%arg0: i32) -> (i32, i32) {
    %c0_i32 = arith.constant 0 : i32
    %c0_i32_0 = arith.constant 0 : i32
    %c0_i32_1 = arith.constant 0 : i32
    return %c0_i32, %c0_i32_0 : i32, i32
  }
  func.func @transform_5(%arg0: i32) -> (i32, i32) {
    %c0_i32 = arith.constant 0 : i32
    %c0_i32_0 = arith.constant 0 : i32
    %c0_i32_1 = arith.constant 0 : i32
    return %c0_i32, %c0_i32_0 : i32, i32
  }
  func.func @transform_6(%arg0: i32) -> (i32, i32) {
    %c0_i32 = arith.constant 0 : i32
    %c0_i32_0 = arith.constant 0 : i32
    %c0_i32_1 = arith.constant 0 : i32
    return %c0_i32, %c0_i32_0 : i32, i32
  }
  func.func @transform_7(%arg0: i32) -> (i32, i32) {
    %c0_i32 = arith.constant 0 : i32
    %c0_i32_0 = arith.constant 0 : i32
    return %arg0, %c0_i32 : i32, i32
  }
}

</mosaic_0001>

<llo_original>
// kernel: tpu_custom_call.1
$region0: #{tpu_custom_call.1}
  #allocation0 [shape = 'u32[]', space=smem, size = 0x4, offset = 0x4, fixed_abs, tag = 'smem constant byte address 0x4 - core index']
  #allocation1 [shape = 'u32[72,128]{1,0:T(1,128)}', space=vmem, size = 0x9000, scoped, tag = 'internal scratch']
  %s0 = inlined_call_operand.vmem [shape: f32[512,16], index: 0, kind: input, shape index: {}]
  %s1 = inlined_call_operand.vmem [shape: f32[16,32], index: 1, kind: input, shape index: {}]
  %s2 = inlined_call_operand.vmem [shape: f32[1,32], index: 2, kind: input, shape index: {}]
  %s3 = inlined_call_operand.vmem [shape: f32[32,32], index: 3, kind: input, shape index: {}]
  %s4 = inlined_call_operand.vmem [shape: f32[1,32], index: 4, kind: input, shape index: {}]
  %s5 = inlined_call_operand.vmem [shape: f32[32,8], index: 5, kind: input, shape index: {}]
  %s6 = inlined_call_operand.vmem [shape: f32[1,8], index: 6, kind: input, shape index: {}]
  %s7 = inlined_call_operand.vmem [shape: f32[512,8], index: 7, kind: output, shape index: {}]
  %s8 = sld [smem:[#allocation0]]
  $region38: #{tpu_custom_call.1} parent=0
    _
  %s10 = ssub.s32 1, %s8
  %s11 = scalar_select 0, %s10, %s8
  // Predicated region
  $region2: #{tpu_custom_call.1} parent=0 // pred_check
    _
  $region3: #{tpu_custom_call.1} parent=0 // pred_check_branch
    %13 = sbr.rel (0) target = $region5
  $region4: #{tpu_custom_call.1} parent=0 // pred_region
    _
  $region5: #{tpu_custom_call.1} parent=0 // pred_fallthru
    _
  // Predicated region
  $region6: #{tpu_custom_call.1} parent=0 // pred_check
    _
  $region7: #{tpu_custom_call.1} parent=0 // pred_check_branch
    %15 = sbr.rel (0) target = $region9
  $region8: #{tpu_custom_call.1} parent=0 // pred_region
    _
  $region9: #{tpu_custom_call.1} parent=0 // pred_fallthru
    _
  // Predicated region
  $region10: #{tpu_custom_call.1} parent=0 // pred_check
    _
  $region11: #{tpu_custom_call.1} parent=0 // pred_check_branch
    %17 = sbr.rel (0) target = $region13
  $region12: #{tpu_custom_call.1} parent=0 // pred_region
    _
  $region13: #{tpu_custom_call.1} parent=0 // pred_fallthru
    _
  // Predicated region
  $region14: #{tpu_custom_call.1} parent=0 // pred_check
    _
  $region15: #{tpu_custom_call.1} parent=0 // pred_check_branch
    %19 = sbr.rel (0) target = $region17
  $region16: #{tpu_custom_call.1} parent=0 // pred_region
    _
  $region17: #{tpu_custom_call.1} parent=0 // pred_fallthru
    _
  // Predicated region
  $region18: #{tpu_custom_call.1} parent=0 // pred_check
    _
  $region19: #{tpu_custom_call.1} parent=0 // pred_check_branch
    %21 = sbr.rel (0) target = $region21
  $region20: #{tpu_custom_call.1} parent=0 // pred_region
    _
  $region21: #{tpu_custom_call.1} parent=0 // pred_fallthru
    _
  // Predicated region
  $region22: #{tpu_custom_call.1} parent=0 // pred_check
    _
  $region23: #{tpu_custom_call.1} parent=0 // pred_check_branch
    %23 = sbr.rel (0) target = $region25
  $region24: #{tpu_custom_call.1} parent=0 // pred_region
    _
  $region25: #{tpu_custom_call.1} parent=0 // pred_fallthru
    _
  // Predicated region
  $region26: #{tpu_custom_call.1} parent=0 // pred_check
    _
  $region27: #{tpu_custom_call.1} parent=0 // pred_check_branch
    %25 = sbr.rel (0) target = $region29
  $region28: #{tpu_custom_call.1} parent=0 // pred_region
    _
  $region29: #{tpu_custom_call.1} parent=0 // pred_fallthru
    _
  %v26 = vld [vmem:[%s0] sm:$0xff]
  %v27 = vld [vmem:[%s0 + $0x8] sm:$0xff]
  %v28 = vld [vmem:[%s0 + $0x10] sm:$0xff]
  %v29 = vld [vmem:[%s0 + $0x18] sm:$0xff]
  %v30 = vld [vmem:[%s0 + $0x20] sm:$0xff]
  %v31 = vld [vmem:[%s0 + $0x28] sm:$0xff]
  %v32 = vld [vmem:[%s0 + $0x30] sm:$0xff]
  %v33 = vld [vmem:[%s0 + $0x38] sm:$0xff]
  %v34 = vld [vmem:[%s0 + $0x40] sm:$0xff]
  %v35 = vld [vmem:[%s0 + $0x48] sm:$0xff]
  %v36 = vld [vmem:[%s0 + $0x50] sm:$0xff]
  %v37 = vld [vmem:[%s0 + $0x58] sm:$0xff]
  %v38 = vld [vmem:[%s0 + $0x60] sm:$0xff]
  %v39 = vld [vmem:[%s0 + $0x68] sm:$0xff]
  %v40 = vld [vmem:[%s0 + $0x70] sm:$0xff]
  %v41 = vld [vmem:[%s0 + $0x78] sm:$0xff]
  %v42 = vld [vmem:[%s0 + $0x80] sm:$0xff]
  %v43 = vld [vmem:[%s0 + $0x88] sm:$0xff]
  %v44 = vld [vmem:[%s0 + $0x90] sm:$0xff]
  %v45 = vld [vmem:[%s0 + $0x98] sm:$0xff]
  %v46 = vld [vmem:[%s0 + $0xa0] sm:$0xff]
  %v47 = vld [vmem:[%s0 + $0xa8] sm:$0xff]
  %v48 = vld [vmem:[%s0 + $0xb0] sm:$0xff]
  %v49 = vld [vmem:[%s0 + $0xb8] sm:$0xff]
  %v50 = vld [vmem:[%s0 + $0xc0] sm:$0xff]
  %v51 = vld [vmem:[%s0 + $0xc8] sm:$0xff]
  %v52 = vld [vmem:[%s0 + $0xd0] sm:$0xff]
  %v53 = vld [vmem:[%s0 + $0xd8] sm:$0xff]
  %v54 = vld [vmem:[%s0 + $0xe0] sm:$0xff]
  %v55 = vld [vmem:[%s0 + $0xe8] sm:$0xff]
  %v56 = vld [vmem:[%s0 + $0xf0] sm:$0xff]
  %v57 = vld [vmem:[%s0 + $0xf8] sm:$0xff]
  %v58 = vld [vmem:[%s0 + $0x100] sm:$0xff]
  %v59 = vld [vmem:[%s0 + $0x108] sm:$0xff]
  %v60 = vld [vmem:[%s0 + $0x110] sm:$0xff]
  %v61 = vld [vmem:[%s0 + $0x118] sm:$0xff]
  %v62 = vld [vmem:[%s0 + $0x120] sm:$0xff]
  %v63 = vld [vmem:[%s0 + $0x128] sm:$0xff]
  %v64 = vld [vmem:[%s0 + $0x130] sm:$0xff]
  %v65 = vld [vmem:[%s0 + $0x138] sm:$0xff]
  %v66 = vld [vmem:[%s0 + $0x140] sm:$0xff]
  %v67 = vld [vmem:[%s0 + $0x148] sm:$0xff]
  %v68 = vld [vmem:[%s0 + $0x150] sm:$0xff]
  %v69 = vld [vmem:[%s0 + $0x158] sm:$0xff]
  %v70 = vld [vmem:[%s0 + $0x160] sm:$0xff]
  %v71 = vld [vmem:[%s0 + $0x168] sm:$0xff]
  %v72 = vld [vmem:[%s0 + $0x170] sm:$0xff]
  %v73 = vld [vmem:[%s0 + $0x178] sm:$0xff]
  %v74 = vld [vmem:[%s0 + $0x180] sm:$0xff]
  %v75 = vld [vmem:[%s0 + $0x188] sm:$0xff]
  %v76 = vld [vmem:[%s0 + $0x190] sm:$0xff]
  %v77 = vld [vmem:[%s0 + $0x198] sm:$0xff]
  %v78 = vld [vmem:[%s0 + $0x1a0] sm:$0xff]
  %v79 = vld [vmem:[%s0 + $0x1a8] sm:$0xff]
  %v80 = vld [vmem:[%s0 + $0x1b0] sm:$0xff]
  %v81 = vld [vmem:[%s0 + $0x1b8] sm:$0xff]
  %v82 = vld [vmem:[%s0 + $0x1c0] sm:$0xff]
  %v83 = vld [vmem:[%s0 + $0x1c8] sm:$0xff]
  %v84 = vld [vmem:[%s0 + $0x1d0] sm:$0xff]
  %v85 = vld [vmem:[%s0 + $0x1d8] sm:$0xff]
  %v86 = vld [vmem:[%s0 + $0x1e0] sm:$0xff]
  %v87 = vld [vmem:[%s0 + $0x1e8] sm:$0xff]
  %v88 = vld [vmem:[%s0 + $0x1f0] sm:$0xff]
  %v89 = vld [vmem:[%s0 + $0x1f8] sm:$0xff]
  %v90 = vld [vmem:[%s1] sm:$0xff]
  %v91 = vld [vmem:[%s1 + $0x8] sm:$0xff]
  %v92 = vld [vmem:[%s2] sm:$0x1]
  %v94 = vperm.slane %v92, 0
  %vm96 = vcmask 130048
  %v98 = vsel %vm96, %v26, 0
  %v101 = vsel %vm96, %v27, 0
  %v104 = vsel %vm96, %v28, 0
  %v107 = vsel %vm96, %v29, 0
  %v110 = vsel %vm96, %v30, 0
  %v113 = vsel %vm96, %v31, 0
  %v116 = vsel %vm96, %v32, 0
  %v119 = vsel %vm96, %v33, 0
  %v122 = vsel %vm96, %v34, 0
  %v125 = vsel %vm96, %v35, 0
  %v128 = vsel %vm96, %v36, 0
  %v131 = vsel %vm96, %v37, 0
  %v134 = vsel %vm96, %v38, 0
  %v137 = vsel %vm96, %v39, 0
  %v140 = vsel %vm96, %v40, 0
  %v143 = vsel %vm96, %v41, 0
  %v146 = vsel %vm96, %v42, 0
  %v149 = vsel %vm96, %v43, 0
  %v152 = vsel %vm96, %v44, 0
  %v155 = vsel %vm96, %v45, 0
  %v158 = vsel %vm96, %v46, 0
  %v161 = vsel %vm96, %v47, 0
  %v164 = vsel %vm96, %v48, 0
  %v167 = vsel %vm96, %v49, 0
  %v170 = vsel %vm96, %v50, 0
  %v173 = vsel %vm96, %v51, 0
  %v176 = vsel %vm96, %v52, 0
  %v179 = vsel %vm96, %v53, 0
  %v182 = vsel %vm96, %v54, 0
  %v185 = vsel %vm96, %v55, 0
  %v188 = vsel %vm96, %v56, 0
  %v191 = vsel %vm96, %v57, 0
  %v194 = vsel %vm96, %v58, 0
  %v197 = vsel %vm96, %v59, 0
  %v200 = vsel %vm96, %v60, 0
  %v203 = vsel %vm96, %v61, 0
  %v206 = vsel %vm96, %v62, 0
  %v209 = vsel %vm96, %v63, 0
  %v212 = vsel %vm96, %v64, 0
  %v215 = vsel %vm96, %v65, 0
  %v218 = vsel %vm96, %v66, 0
  %v221 = vsel %vm96, %v67, 0
  %v224 = vsel %vm96, %v68, 0
  %v227 = vsel %vm96, %v69, 0
  %v230 = vsel %vm96, %v70, 0
  %v233 = vsel %vm96, %v71, 0
  %v236 = vsel %vm96, %v72, 0
  %v239 = vsel %vm96, %v73, 0
  %v242 = vsel %vm96, %v74, 0
  %v245 = vsel %vm96, %v75, 0
  %v248 = vsel %vm96, %v76, 0
  %v251 = vsel %vm96, %v77, 0
  %v254 = vsel %vm96, %v78, 0
  %v257 = vsel %vm96, %v79, 0
  %v260 = vsel %vm96, %v80, 0
  %v263 = vsel %vm96, %v81, 0
  %v266 = vsel %vm96, %v82, 0
  %v269 = vsel %vm96, %v83, 0
  %v272 = vsel %vm96, %v84, 0
  %v275 = vsel %vm96, %v85, 0
  %v278 = vsel %vm96, %v86, 0
  %v281 = vsel %vm96, %v87, 0
  %v284 = vsel %vm96, %v88, 0
  %v287 = vsel %vm96, %v89, 0
  %289 = vmatpush.msra.mxu0 0.0
  %290 = vmatpush.msra.mxu0 0.0
  %291 = vmatpush.msra.mxu0 0.0
  %292 = vmatpush.msra.mxu0 0.0
  %293 = vmatpush.msra.mxu0 0.0
  %294 = vmatpush.msra.mxu0 0.0
  %295 = vmatpush.msra.mxu0 0.0
  %296 = vmatpush.msra.mxu0 0.0
  %297 = vmatpush.msra.mxu0 0.0
  %298 = vmatpush.msra.mxu0 0.0
  %299 = vmatpush.msra.mxu0 0.0
  %300 = vmatpush.msra.mxu0 0.0
  %301 = vmatpush.msra.mxu0 0.0
  %302 = vmatpush.msra.mxu0 0.0
  %303 = vmatpush.msra.mxu0 %v91
  %304 = vmatpush.msra.mxu0 %v90
  %305 = vmatmul.f32.gmra.mxu0 %v98
  %v306 = vpop.f32.mrf.mxu0
  %v307 = vadd.f32 %v94, %v306
  %308 = vmatmul.f32.gmra.mxu0 %v101
  %v309 = vpop.f32.mrf.mxu0
  %v310 = vadd.f32 %v94, %v309
  %311 = vmatmul.f32.gmra.mxu0 %v104
  %v312 = vpop.f32.mrf.mxu0
  %v313 = vadd.f32 %v94, %v312
  %314 = vmatmul.f32.gmra.mxu0 %v107
  %v315 = vpop.f32.mrf.mxu0
  %v316 = vadd.f32 %v94, %v315
  %317 = vmatmul.f32.gmra.mxu0 %v110
  %v318 = vpop.f32.mrf.mxu0
  %v319 = vadd.f32 %v94, %v318
  %320 = vmatmul.f32.gmra.mxu0 %v113
  %v321 = vpop.f32.mrf.mxu0
  %v322 = vadd.f32 %v94, %v321
  %323 = vmatmul.f32.gmra.mxu0 %v116
  %v324 = vpop.f32.mrf.mxu0
  %v325 = vadd.f32 %v94, %v324
  %326 = vmatmul.f32.gmra.mxu0 %v119
  %v327 = vpop.f32.mrf.mxu0
  %v328 = vadd.f32 %v94, %v327
  %329 = vmatmul.f32.gmra.mxu0 %v122
  %v330 = vpop.f32.mrf.mxu0
  %v331 = vadd.f32 %v94, %v330
  %332 = vmatmul.f32.gmra.mxu0 %v125
  %v333 = vpop.f32.mrf.mxu0
  %v334 = vadd.f32 %v94, %v333
  %335 = vmatmul.f32.gmra.mxu0 %v128
  %v336 = vpop.f32.mrf.mxu0
  %v337 = vadd.f32 %v94, %v336
  %338 = vmatmul.f32.gmra.mxu0 %v131
  %v339 = vpop.f32.mrf.mxu0
  %v340 = vadd.f32 %v94, %v339
  %341 = vmatmul.f32.gmra.mxu0 %v134
  %v342 = vpop.f32.mrf.mxu0
  %v343 = vadd.f32 %v94, %v342
  %344 = vmatmul.f32.gmra.mxu0 %v137
  %v345 = vpop.f32.mrf.mxu0
  %v346 = vadd.f32 %v94, %v345
  %347 = vmatmul.f32.gmra.mxu0 %v140
  %v348 = vpop.f32.mrf.mxu0
  %v349 = vadd.f32 %v94, %v348
  %350 = vmatmul.f32.gmra.mxu0 %v143
  %v351 = vpop.f32.mrf.mxu0
  %v352 = vadd.f32 %v94, %v351
  %353 = vmatmul.f32.gmra.mxu0 %v146
  %v354 = vpop.f32.mrf.mxu0
  %v355 = vadd.f32 %v94, %v354
  %356 = vmatmul.f32.gmra.mxu0 %v149
  %v357 = vpop.f32.mrf.mxu0
  %v358 = vadd.f32 %v94, %v357
  %359 = vmatmul.f32.gmra.mxu0 %v152
  %v360 = vpop.f32.mrf.mxu0
  %v361 = vadd.f32 %v94, %v360
  %362 = vmatmul.f32.gmra.mxu0 %v155
  %v363 = vpop.f32.mrf.mxu0
  %v364 = vadd.f32 %v94, %v363
  %365 = vmatmul.f32.gmra.mxu0 %v158
  %v366 = vpop.f32.mrf.mxu0
  %v367 = vadd.f32 %v94, %v366
  %368 = vmatmul.f32.gmra.mxu0 %v161
  %v369 = vpop.f32.mrf.mxu0
  %v370 = vadd.f32 %v94, %v369
  %371 = vmatmul.f32.gmra.mxu0 %v164
  %v372 = vpop.f32.mrf.mxu0
  %v373 = vadd.f32 %v94, %v372
  %374 = vmatmul.f32.gmra.mxu0 %v167
  %v375 = vpop.f32.mrf.mxu0
  %v376 = vadd.f32 %v94, %v375
  %377 = vmatmul.f32.gmra.mxu0 %v170
  %v378 = vpop.f32.mrf.mxu0
  %v379 = vadd.f32 %v94, %v378
  %380 = vmatmul.f32.gmra.mxu0 %v173
  %v381 = vpop.f32.mrf.mxu0
  %v382 = vadd.f32 %v94, %v381
  %383 = vmatmul.f32.gmra.mxu0 %v176
  %v384 = vpop.f32.mrf.mxu0
  %v385 = vadd.f32 %v94, %v384
  %386 = vmatmul.f32.gmra.mxu0 %v179
  %v387 = vpop.f32.mrf.mxu0
  %v388 = vadd.f32 %v94, %v387
  %389 = vmatmul.f32.gmra.mxu0 %v182
  %v390 = vpop.f32.mrf.mxu0
  %v391 = vadd.f32 %v94, %v390
  %392 = vmatmul.f32.gmra.mxu0 %v185
  %v393 = vpop.f32.mrf.mxu0
  %v394 = vadd.f32 %v94, %v393
  %395 = vmatmul.f32.gmra.mxu0 %v188
  %v396 = vpop.f32.mrf.mxu0
  %v397 = vadd.f32 %v94, %v396
  %398 = vmatmul.f32.gmra.mxu0 %v191
  %v399 = vpop.f32.mrf.mxu0
  %v400 = vadd.f32 %v94, %v399
  %401 = vmatmul.f32.gmra.mxu0 %v194
  %v402 = vpop.f32.mrf.mxu0
  %v403 = vadd.f32 %v94, %v402
  %404 = vmatmul.f32.gmra.mxu0 %v197
  %v405 = vpop.f32.mrf.mxu0
  %v406 = vadd.f32 %v94, %v405
  %407 = vmatmul.f32.gmra.mxu0 %v200
  %v408 = vpop.f32.mrf.mxu0
  %v409 = vadd.f32 %v94, %v408
  %410 = vmatmul.f32.gmra.mxu0 %v203
  %v411 = vpop.f32.mrf.mxu0
  %v412 = vadd.f32 %v94, %v411
  %413 = vmatmul.f32.gmra.mxu0 %v206
  %v414 = vpop.f32.mrf.mxu0
  %v415 = vadd.f32 %v94, %v414
  %416 = vmatmul.f32.gmra.mxu0 %v209
  %v417 = vpop.f32.mrf.mxu0
  %v418 = vadd.f32 %v94, %v417
  %419 = vmatmul.f32.gmra.mxu0 %v212
  %v420 = vpop.f32.mrf.mxu0
  %v421 = vadd.f32 %v94, %v420
  %422 = vmatmul.f32.gmra.mxu0 %v215
  %v423 = vpop.f32.mrf.mxu0
  %v424 = vadd.f32 %v94, %v423
  %425 = vmatmul.f32.gmra.mxu0 %v218
  %v426 = vpop.f32.mrf.mxu0
  %v427 = vadd.f32 %v94, %v426
  %428 = vmatmul.f32.gmra.mxu0 %v221
  %v429 = vpop.f32.mrf.mxu0
  %v430 = vadd.f32 %v94, %v429
  %431 = vmatmul.f32.gmra.mxu0 %v224
  %v432 = vpop.f32.mrf.mxu0
  %v433 = vadd.f32 %v94, %v432
  %434 = vmatmul.f32.gmra.mxu0 %v227
  %v435 = vpop.f32.mrf.mxu0
  %v436 = vadd.f32 %v94, %v435
  %437 = vmatmul.f32.gmra.mxu0 %v230
  %v438 = vpop.f32.mrf.mxu0
  %v439 = vadd.f32 %v94, %v438
  %440 = vmatmul.f32.gmra.mxu0 %v233
  %v441 = vpop.f32.mrf.mxu0
  %v442 = vadd.f32 %v94, %v441
  %443 = vmatmul.f32.gmra.mxu0 %v236
  %v444 = vpop.f32.mrf.mxu0
  %v445 = vadd.f32 %v94, %v444
  %446 = vmatmul.f32.gmra.mxu0 %v239
  %v447 = vpop.f32.mrf.mxu0
  %v448 = vadd.f32 %v94, %v447
  %449 = vmatmul.f32.gmra.mxu0 %v242
  %v450 = vpop.f32.mrf.mxu0
  %v451 = vadd.f32 %v94, %v450
  %452 = vmatmul.f32.gmra.mxu0 %v245
  %v453 = vpop.f32.mrf.mxu0
  %v454 = vadd.f32 %v94, %v453
  %455 = vmatmul.f32.gmra.mxu0 %v248
  %v456 = vpop.f32.mrf.mxu0
  %v457 = vadd.f32 %v94, %v456
  %458 = vmatmul.f32.gmra.mxu0 %v251
  %v459 = vpop.f32.mrf.mxu0
  %v460 = vadd.f32 %v94, %v459
  %461 = vmatmul.f32.gmra.mxu0 %v254
  %v462 = vpop.f32.mrf.mxu0
  %v463 = vadd.f32 %v94, %v462
  %464 = vmatmul.f32.gmra.mxu0 %v257
  %v465 = vpop.f32.mrf.mxu0
  %v466 = vadd.f32 %v94, %v465
  %467 = vmatmul.f32.gmra.mxu0 %v260
  %v468 = vpop.f32.mrf.mxu0
  %v469 = vadd.f32 %v94, %v468
  %470 = vmatmul.f32.gmra.mxu0 %v263
  %v471 = vpop.f32.mrf.mxu0
  %v472 = vadd.f32 %v94, %v471
  %473 = vmatmul.f32.gmra.mxu0 %v266
  %v474 = vpop.f32.mrf.mxu0
  %v475 = vadd.f32 %v94, %v474
  %476 = vmatmul.f32.gmra.mxu0 %v269
  %v477 = vpop.f32.mrf.mxu0
  %v478 = vadd.f32 %v94, %v477
  %479 = vmatmul.f32.gmra.mxu0 %v272
  %v480 = vpop.f32.mrf.mxu0
  %v481 = vadd.f32 %v94, %v480
  %482 = vmatmul.f32.gmra.mxu0 %v275
  %v483 = vpop.f32.mrf.mxu0
  %v484 = vadd.f32 %v94, %v483
  %485 = vmatmul.f32.gmra.mxu0 %v278
  %v486 = vpop.f32.mrf.mxu0
  %v487 = vadd.f32 %v94, %v486
  %488 = vmatmul.f32.gmra.mxu0 %v281
  %v489 = vpop.f32.mrf.mxu0
  %v490 = vadd.f32 %v94, %v489
  %491 = vmatmul.f32.gmra.mxu0 %v284
  %v492 = vpop.f32.mrf.mxu0
  %v493 = vadd.f32 %v94, %v492
  %494 = vmatmul.f32.gmra.mxu0 %v287
  %v495 = vpop.f32.mrf.mxu0
  %v496 = vadd.f32 %v94, %v495
  %497 = vdwg.mxu0
  %v498 = vmax.f32 %v307, 0.0
  %v499 = vmax.f32 %v310, 0.0
  %v500 = vmax.f32 %v313, 0.0
  %v501 = vmax.f32 %v316, 0.0
  %v502 = vmax.f32 %v319, 0.0
  %v503 = vmax.f32 %v322, 0.0
  %v504 = vmax.f32 %v325, 0.0
  %v505 = vmax.f32 %v328, 0.0
  %v506 = vmax.f32 %v331, 0.0
  %v507 = vmax.f32 %v334, 0.0
  %v508 = vmax.f32 %v337, 0.0
  %v509 = vmax.f32 %v340, 0.0
  %v510 = vmax.f32 %v343, 0.0
  %v511 = vmax.f32 %v346, 0.0
  %v512 = vmax.f32 %v349, 0.0
  %v513 = vmax.f32 %v352, 0.0
  %v514 = vmax.f32 %v355, 0.0
  %v515 = vmax.f32 %v358, 0.0
  %v516 = vmax.f32 %v361, 0.0
  %v517 = vmax.f32 %v364, 0.0
  %v518 = vmax.f32 %v367, 0.0
  %v519 = vmax.f32 %v370, 0.0
  %v520 = vmax.f32 %v373, 0.0
  %v521 = vmax.f32 %v376, 0.0
  %v522 = vmax.f32 %v379, 0.0
  %v523 = vmax.f32 %v382, 0.0
  %v524 = vmax.f32 %v385, 0.0
  %v525 = vmax.f32 %v388, 0.0
  %v526 = vmax.f32 %v391, 0.0
  %v527 = vmax.f32 %v394, 0.0
  %v528 = vmax.f32 %v397, 0.0
  %v529 = vmax.f32 %v400, 0.0
  %v530 = vmax.f32 %v403, 0.0
  %v531 = vmax.f32 %v406, 0.0
  %v532 = vmax.f32 %v409, 0.0
  %v533 = vmax.f32 %v412, 0.0
  %v534 = vmax.f32 %v415, 0.0
  %v535 = vmax.f32 %v418, 0.0
  %v536 = vmax.f32 %v421, 0.0
  %v537 = vmax.f32 %v424, 0.0
  %v538 = vmax.f32 %v427, 0.0
  %v539 = vmax.f32 %v430, 0.0
  %v540 = vmax.f32 %v433, 0.0
  %v541 = vmax.f32 %v436, 0.0
  %v542 = vmax.f32 %v439, 0.0
  %v543 = vmax.f32 %v442, 0.0
  %v544 = vmax.f32 %v445, 0.0
  %v545 = vmax.f32 %v448, 0.0
  %v546 = vmax.f32 %v451, 0.0
  %v547 = vmax.f32 %v454, 0.0
  %v548 = vmax.f32 %v457, 0.0
  %v549 = vmax.f32 %v460, 0.0
  %v550 = vmax.f32 %v463, 0.0
  %v551 = vmax.f32 %v466, 0.0
  %v552 = vmax.f32 %v469, 0.0
  %v553 = vmax.f32 %v472, 0.0
  %v554 = vmax.f32 %v475, 0.0
  %v555 = vmax.f32 %v478, 0.0
  %v556 = vmax.f32 %v481, 0.0
  %v557 = vmax.f32 %v484, 0.0
  %v558 = vmax.f32 %v487, 0.0
  %v559 = vmax.f32 %v490, 0.0
  %v560 = vmax.f32 %v493, 0.0
  %v561 = vmax.f32 %v496, 0.0
  %v562 = vld [vmem:[%s3] sm:$0xff]
  %v563 = vld [vmem:[%s3 + $0x8] sm:$0xff]
  %v564 = vld [vmem:[%s3 + $0x10] sm:$0xff]
  %v565 = vld [vmem:[%s3 + $0x18] sm:$0xff]
  %v566 = vld [vmem:[%s4] sm:$0x1]
  %v568 = vperm.slane %v566, 0
  %vm570 = vcmask 261120
  %v572 = vsel %vm570, %v498, 0
  %v575 = vsel %vm570, %v499, 0
  %v578 = vsel %vm570, %v500, 0
  %v581 = vsel %vm570, %v501, 0
  %v584 = vsel %vm570, %v502, 0
  %v587 = vsel %vm570, %v503, 0
  %v590 = vsel %vm570, %v504, 0
  %v593 = vsel %vm570, %v505, 0
  %v596 = vsel %vm570, %v506, 0
  %v599 = vsel %vm570, %v507, 0
  %v602 = vsel %vm570, %v508, 0
  %v605 = vsel %vm570, %v509, 0
  %v608 = vsel %vm570, %v510, 0
  %v611 = vsel %vm570, %v511, 0
  %v614 = vsel %vm570, %v512, 0
  %v617 = vsel %vm570, %v513, 0
  %v620 = vsel %vm570, %v514, 0
  %v623 = vsel %vm570, %v515, 0
  %v626 = vsel %vm570, %v516, 0
  %v629 = vsel %vm570, %v517, 0
  %v632 = vsel %vm570, %v518, 0
  %v635 = vsel %vm570, %v519, 0
  %v638 = vsel %vm570, %v520, 0
  %v641 = vsel %vm570, %v521, 0
  %v644 = vsel %vm570, %v522, 0
  %v647 = vsel %vm570, %v523, 0
  %v650 = vsel %vm570, %v524, 0
  %v653 = vsel %vm570, %v525, 0
  %v656 = vsel %vm570, %v526, 0
  %v659 = vsel %vm570, %v527, 0
  %v662 = vsel %vm570, %v528, 0
  %v665 = vsel %vm570, %v529, 0
  %v668 = vsel %vm570, %v530, 0
  %v671 = vsel %vm570, %v531, 0
  %v674 = vsel %vm570, %v532, 0
  %v677 = vsel %vm570, %v533, 0
  %v680 = vsel %vm570, %v534, 0
  %v683 = vsel %vm570, %v535, 0
  %v686 = vsel %vm570, %v536, 0
  %v689 = vsel %vm570, %v537, 0
  %v692 = vsel %vm570, %v538, 0
  %v695 = vsel %vm570, %v539, 0
  %v698 = vsel %vm570, %v540, 0
  %v701 = vsel %vm570, %v541, 0
  %v704 = vsel %vm570, %v542, 0
  %v707 = vsel %vm570, %v543, 0
  %v710 = vsel %vm570, %v544, 0
  %v713 = vsel %vm570, %v545, 0
  %v716 = vsel %vm570, %v546, 0
  %v719 = vsel %vm570, %v547, 0
  %v722 = vsel %vm570, %v548, 0
  %v725 = vsel %vm570, %v549, 0
  %v728 = vsel %vm570, %v550, 0
  %v731 = vsel %vm570, %v551, 0
  %v734 = vsel %vm570, %v552, 0
  %v737 = vsel %vm570, %v553, 0
  %v740 = vsel %vm570, %v554, 0
  %v743 = vsel %vm570, %v555, 0
  %v746 = vsel %vm570, %v556, 0
  %v749 = vsel %vm570, %v557, 0
  %v752 = vsel %vm570, %v558, 0
  %v755 = vsel %vm570, %v559, 0
  %v758 = vsel %vm570, %v560, 0
  %v761 = vsel %vm570, %v561, 0
  %763 = vmatpush.msra.mxu0 0.0
  %764 = vmatpush.msra.mxu0 0.0
  %765 = vmatpush.msra.mxu0 0.0
  %766 = vmatpush.msra.mxu0 0.0
  %767 = vmatpush.msra.mxu0 0.0
  %768 = vmatpush.msra.mxu0 0.0
  %769 = vmatpush.msra.mxu0 0.0
  %770 = vmatpush.msra.mxu0 0.0
  %771 = vmatpush.msra.mxu0 0.0
  %772 = vmatpush.msra.mxu0 0.0
  %773 = vmatpush.msra.mxu0 0.0
  %774 = vmatpush.msra.mxu0 0.0
  %775 = vmatpush.msra.mxu0 %v565
  %776 = vmatpush.msra.mxu0 %v564
  %777 = vmatpush.msra.mxu0 %v563
  %778 = vmatpush.msra.mxu0 %v562
  %779 = vmatmul.f32.gmra.mxu0 %v572
  %v780 = vpop.f32.mrf.mxu0
  %v781 = vadd.f32 %v568, %v780
  %782 = vmatmul.f32.gmra.mxu0 %v575
  %v783 = vpop.f32.mrf.mxu0
  %v784 = vadd.f32 %v568, %v783
  %785 = vmatmul.f32.gmra.mxu0 %v578
  %v786 = vpop.f32.mrf.mxu0
  %v787 = vadd.f32 %v568, %v786
  %788 = vmatmul.f32.gmra.mxu0 %v581
  %v789 = vpop.f32.mrf.mxu0
  %v790 = vadd.f32 %v568, %v789
  %791 = vmatmul.f32.gmra.mxu0 %v584
  %v792 = vpop.f32.mrf.mxu0
  %v793 = vadd.f32 %v568, %v792
  %794 = vmatmul.f32.gmra.mxu0 %v587
  %v795 = vpop.f32.mrf.mxu0
  %v796 = vadd.f32 %v568, %v795
  %797 = vmatmul.f32.gmra.mxu0 %v590
  %v798 = vpop.f32.mrf.mxu0
  %v799 = vadd.f32 %v568, %v798
  %800 = vmatmul.f32.gmra.mxu0 %v593
  %v801 = vpop.f32.mrf.mxu0
  %v802 = vadd.f32 %v568, %v801
  %803 = vmatmul.f32.gmra.mxu0 %v596
  %v804 = vpop.f32.mrf.mxu0
  %v805 = vadd.f32 %v568, %v804
  %806 = vmatmul.f32.gmra.mxu0 %v599
  %v807 = vpop.f32.mrf.mxu0
  %v808 = vadd.f32 %v568, %v807
  %809 = vmatmul.f32.gmra.mxu0 %v602
  %v810 = vpop.f32.mrf.mxu0
  %v811 = vadd.f32 %v568, %v810
  %812 = vmatmul.f32.gmra.mxu0 %v605
  %v813 = vpop.f32.mrf.mxu0
  %v814 = vadd.f32 %v568, %v813
  %815 = vmatmul.f32.gmra.mxu0 %v608
  %v816 = vpop.f32.mrf.mxu0
  %v817 = vadd.f32 %v568, %v816
  %818 = vmatmul.f32.gmra.mxu0 %v611
  %v819 = vpop.f32.mrf.mxu0
  %v820 = vadd.f32 %v568, %v819
  %821 = vmatmul.f32.gmra.mxu0 %v614
  %v822 = vpop.f32.mrf.mxu0
  %v823 = vadd.f32 %v568, %v822
  %824 = vmatmul.f32.gmra.mxu0 %v617
  %v825 = vpop.f32.mrf.mxu0
  %v826 = vadd.f32 %v568, %v825
  %827 = vmatmul.f32.gmra.mxu0 %v620
  %v828 = vpop.f32.mrf.mxu0
  %v829 = vadd.f32 %v568, %v828
  %830 = vmatmul.f32.gmra.mxu0 %v623
  %v831 = vpop.f32.mrf.mxu0
  %v832 = vadd.f32 %v568, %v831
  %833 = vmatmul.f32.gmra.mxu0 %v626
  %v834 = vpop.f32.mrf.mxu0
  %v835 = vadd.f32 %v568, %v834
  %836 = vmatmul.f32.gmra.mxu0 %v629
  %v837 = vpop.f32.mrf.mxu0
  %v838 = vadd.f32 %v568, %v837
  %839 = vmatmul.f32.gmra.mxu0 %v632
  %v840 = vpop.f32.mrf.mxu0
  %v841 = vadd.f32 %v568, %v840
  %842 = vmatmul.f32.gmra.mxu0 %v635
  %v843 = vpop.f32.mrf.mxu0
  %v844 = vadd.f32 %v568, %v843
  %845 = vmatmul.f32.gmra.mxu0 %v638
  %v846 = vpop.f32.mrf.mxu0
  %v847 = vadd.f32 %v568, %v846
  %848 = vmatmul.f32.gmra.mxu0 %v641
  %v849 = vpop.f32.mrf.mxu0
  %v850 = vadd.f32 %v568, %v849
  %851 = vmatmul.f32.gmra.mxu0 %v644
  %v852 = vpop.f32.mrf.mxu0
  %v853 = vadd.f32 %v568, %v852
  %854 = vmatmul.f32.gmra.mxu0 %v647
  %v855 = vpop.f32.mrf.mxu0
  %v856 = vadd.f32 %v568, %v855
  %857 = vmatmul.f32.gmra.mxu0 %v650
  %v858 = vpop.f32.mrf.mxu0
  %v859 = vadd.f32 %v568, %v858
  %860 = vmatmul.f32.gmra.mxu0 %v653
  %v861 = vpop.f32.mrf.mxu0
  %v862 = vadd.f32 %v568, %v861
  %863 = vmatmul.f32.gmra.mxu0 %v656
  %v864 = vpop.f32.mrf.mxu0
  %v865 = vadd.f32 %v568, %v864
  %866 = vmatmul.f32.gmra.mxu0 %v659
  %v867 = vpop.f32.mrf.mxu0
  %v868 = vadd.f32 %v568, %v867
  %869 = vmatmul.f32.gmra.mxu0 %v662
  %v870 = vpop.f32.mrf.mxu0
  %v871 = vadd.f32 %v568, %v870
  %872 = vmatmul.f32.gmra.mxu0 %v665
  %v873 = vpop.f32.mrf.mxu0
  %v874 = vadd.f32 %v568, %v873
  %875 = vmatmul.f32.gmra.mxu0 %v668
  %v876 = vpop.f32.mrf.mxu0
  %v877 = vadd.f32 %v568, %v876
  %878 = vmatmul.f32.gmra.mxu0 %v671
  %v879 = vpop.f32.mrf.mxu0
  %v880 = vadd.f32 %v568, %v879
  %881 = vmatmul.f32.gmra.mxu0 %v674
  %v882 = vpop.f32.mrf.mxu0
  %v883 = vadd.f32 %v568, %v882
  %884 = vmatmul.f32.gmra.mxu0 %v677
  %v885 = vpop.f32.mrf.mxu0
  %v886 = vadd.f32 %v568, %v885
  %887 = vmatmul.f32.gmra.mxu0 %v680
  %v888 = vpop.f32.mrf.mxu0
  %v889 = vadd.f32 %v568, %v888
  %890 = vmatmul.f32.gmra.mxu0 %v683
  %v891 = vpop.f32.mrf.mxu0
  %v892 = vadd.f32 %v568, %v891
  %893 = vmatmul.f32.gmra.mxu0 %v686
  %v894 = vpop.f32.mrf.mxu0
  %v895 = vadd.f32 %v568, %v894
  %896 = vmatmul.f32.gmra.mxu0 %v689
  %v897 = vpop.f32.mrf.mxu0
  %v898 = vadd.f32 %v568, %v897
  %899 = vmatmul.f32.gmra.mxu0 %v692
  %v900 = vpop.f32.mrf.mxu0
  %v901 = vadd.f32 %v568, %v900
  %902 = vmatmul.f32.gmra.mxu0 %v695
  %v903 = vpop.f32.mrf.mxu0
  %v904 = vadd.f32 %v568, %v903
  %905 = vmatmul.f32.gmra.mxu0 %v698
  %v906 = vpop.f32.mrf.mxu0
  %v907 = vadd.f32 %v568, %v906
  %908 = vmatmul.f32.gmra.mxu0 %v701
  %v909 = vpop.f32.mrf.mxu0
  %v910 = vadd.f32 %v568, %v909
  %911 = vmatmul.f32.gmra.mxu0 %v704
  %v912 = vpop.f32.mrf.mxu0
  %v913 = vadd.f32 %v568, %v912
  %914 = vmatmul.f32.gmra.mxu0 %v707
  %v915 = vpop.f32.mrf.mxu0
  %v916 = vadd.f32 %v568, %v915
  %917 = vmatmul.f32.gmra.mxu0 %v710
  %v918 = vpop.f32.mrf.mxu0
  %v919 = vadd.f32 %v568, %v918
  %920 = vmatmul.f32.gmra.mxu0 %v713
  %v921 = vpop.f32.mrf.mxu0
  %v922 = vadd.f32 %v568, %v921
  %923 = vmatmul.f32.gmra.mxu0 %v716
  %v924 = vpop.f32.mrf.mxu0
  %v925 = vadd.f32 %v568, %v924
  %926 = vmatmul.f32.gmra.mxu0 %v719
  %v927 = vpop.f32.mrf.mxu0
  %v928 = vadd.f32 %v568, %v927
  %929 = vmatmul.f32.gmra.mxu0 %v722
  %v930 = vpop.f32.mrf.mxu0
  %v931 = vadd.f32 %v568, %v930
  %932 = vmatmul.f32.gmra.mxu0 %v725
  %v933 = vpop.f32.mrf.mxu0
  %v934 = vadd.f32 %v568, %v933
  %935 = vmatmul.f32.gmra.mxu0 %v728
  %v936 = vpop.f32.mrf.mxu0
  %v937 = vadd.f32 %v568, %v936
  %938 = vmatmul.f32.gmra.mxu0 %v731
  %v939 = vpop.f32.mrf.mxu0
  %v940 = vadd.f32 %v568, %v939
  %941 = vmatmul.f32.gmra.mxu0 %v734
  %v942 = vpop.f32.mrf.mxu0
  %v943 = vadd.f32 %v568, %v942
  %944 = vmatmul.f32.gmra.mxu0 %v737
  %v945 = vpop.f32.mrf.mxu0
  %v946 = vadd.f32 %v568, %v945
  %947 = vmatmul.f32.gmra.mxu0 %v740
  %v948 = vpop.f32.mrf.mxu0
  %v949 = vadd.f32 %v568, %v948
  %950 = vmatmul.f32.gmra.mxu0 %v743
  %v951 = vpop.f32.mrf.mxu0
  %v952 = vadd.f32 %v568, %v951
  %953 = vmatmul.f32.gmra.mxu0 %v746
  %v954 = vpop.f32.mrf.mxu0
  %v955 = vadd.f32 %v568, %v954
  %956 = vmatmul.f32.gmra.mxu0 %v749
  %v957 = vpop.f32.mrf.mxu0
  %v958 = vadd.f32 %v568, %v957
  %959 = vmatmul.f32.gmra.mxu0 %v752
  %v960 = vpop.f32.mrf.mxu0
  %v961 = vadd.f32 %v568, %v960
  %962 = vmatmul.f32.gmra.mxu0 %v755
  %v963 = vpop.f32.mrf.mxu0
  %v964 = vadd.f32 %v568, %v963
  %965 = vmatmul.f32.gmra.mxu0 %v758
  %v966 = vpop.f32.mrf.mxu0
  %v967 = vadd.f32 %v568, %v966
  %968 = vmatmul.f32.gmra.mxu0 %v761
  %v969 = vpop.f32.mrf.mxu0
  %v970 = vadd.f32 %v568, %v969
  %971 = vdwg.mxu0
  %v972 = vtanh.pop %v781
  %v973 = vtanh.pop %v784
  %v974 = vtanh.pop %v787
  %v975 = vtanh.pop %v790
  %v976 = vtanh.pop %v793
  %v977 = vtanh.pop %v796
  %v978 = vtanh.pop %v799
  %v979 = vtanh.pop %v802
  %v980 = vtanh.pop %v805
  %v981 = vtanh.pop %v808
  %v982 = vtanh.pop %v811
  %v983 = vtanh.pop %v814
  %v984 = vtanh.pop %v817
  %v985 = vtanh.pop %v820
  %v986 = vtanh.pop %v823
  %v987 = vtanh.pop %v826
  %v988 = vtanh.pop %v829
  %v989 = vtanh.pop %v832
  %v990 = vtanh.pop %v835
  %v991 = vtanh.pop %v838
  %v992 = vtanh.pop %v841
  %v993 = vtanh.pop %v844
  %v994 = vtanh.pop %v847
  %v995 = vtanh.pop %v850
  %v996 = vtanh.pop %v853
  %v997 = vtanh.pop %v856
  %v998 = vtanh.pop %v859
  %v999 = vtanh.pop %v862
  %v1000 = vtanh.pop %v865
  %v1001 = vtanh.pop %v868
  %v1002 = vtanh.pop %v871
  %v1003 = vtanh.pop %v874
  %v1004 = vtanh.pop %v877
  %v1005 = vtanh.pop %v880
  %v1006 = vtanh.pop %v883
  %v1007 = vtanh.pop %v886
  %v1008 = vtanh.pop %v889
  %v1009 = vtanh.pop %v892
  %v1010 = vtanh.pop %v895
  %v1011 = vtanh.pop %v898
  %v1012 = vtanh.pop %v901
  %v1013 = vtanh.pop %v904
  %v1014 = vtanh.pop %v907
  %v1015 = vtanh.pop %v910
  %v1016 = vtanh.pop %v913
  %v1017 = vtanh.pop %v916
  %v1018 = vtanh.pop %v919
  %v1019 = vtanh.pop %v922
  %v1020 = vtanh.pop %v925
  %v1021 = vtanh.pop %v928
  %v1022 = vtanh.pop %v931
  %v1023 = vtanh.pop %v934
  %v1024 = vtanh.pop %v937
  %v1025 = vtanh.pop %v940
  %v1026 = vtanh.pop %v943
  %v1027 = vtanh.pop %v946
  %v1028 = vtanh.pop %v949
  %v1029 = vtanh.pop %v952
  %v1030 = vtanh.pop %v955
  %v1031 = vtanh.pop %v958
  %v1032 = vtanh.pop %v961
  %v1033 = vtanh.pop %v964
  %v1034 = vtanh.pop %v967
  %v1035 = vtanh.pop %v970
  %v1036 = vld [vmem:[%s5] sm:$0xff]
  %v1037 = vld [vmem:[%s5 + $0x8] sm:$0xff]
  %v1038 = vld [vmem:[%s5 + $0x10] sm:$0xff]
  %v1039 = vld [vmem:[%s5 + $0x18] sm:$0xff]
  %v1040 = vld [vmem:[%s6] sm:$0x1]
  %v1042 = vperm.slane %v1040, 0
  %v1045 = vsel %vm570, %v972, 0
  %v1048 = vsel %vm570, %v973, 0
  %v1051 = vsel %vm570, %v974, 0
  %v1054 = vsel %vm570, %v975, 0
  %v1057 = vsel %vm570, %v976, 0
  %v1060 = vsel %vm570, %v977, 0
  %v1063 = vsel %vm570, %v978, 0
  %v1066 = vsel %vm570, %v979, 0
  %v1069 = vsel %vm570, %v980, 0
  %v1072 = vsel %vm570, %v981, 0
  %v1075 = vsel %vm570, %v982, 0
  %v1078 = vsel %vm570, %v983, 0
  %v1081 = vsel %vm570, %v984, 0
  %v1084 = vsel %vm570, %v985, 0
  %v1087 = vsel %vm570, %v986, 0
  %v1090 = vsel %vm570, %v987, 0
  %v1093 = vsel %vm570, %v988, 0
  %v1096 = vsel %vm570, %v989, 0
  %v1099 = vsel %vm570, %v990, 0
  %v1102 = vsel %vm570, %v991, 0
  %v1105 = vsel %vm570, %v992, 0
  %v1108 = vsel %vm570, %v993, 0
  %v1111 = vsel %vm570, %v994, 0
  %v1114 = vsel %vm570, %v995, 0
  %v1117 = vsel %vm570, %v996, 0
  %v1120 = vsel %vm570, %v997, 0
  %v1123 = vsel %vm570, %v998, 0
  %v1126 = vsel %vm570, %v999, 0
  %v1129 = vsel %vm570, %v1000, 0
  %v1132 = vsel %vm570, %v1001, 0
  %v1135 = vsel %vm570, %v1002, 0
  %v1138 = vsel %vm570, %v1003, 0
  %v1141 = vsel %vm570, %v1004, 0
  %v1144 = vsel %vm570, %v1005, 0
  %v1147 = vsel %vm570, %v1006, 0
  %v1150 = vsel %vm570, %v1007, 0
  %v1153 = vsel %vm570, %v1008, 0
  %v1156 = vsel %vm570, %v1009, 0
  %v1159 = vsel %vm570, %v1010, 0
  %v1162 = vsel %vm570, %v1011, 0
  %v1165 = vsel %vm570, %v1012, 0
  %v1168 = vsel %vm570, %v1013, 0
  %v1171 = vsel %vm570, %v1014, 0
  %v1174 = vsel %vm570, %v1015, 0
  %v1177 = vsel %vm570, %v1016, 0
  %v1180 = vsel %vm570, %v1017, 0
  %v1183 = vsel %vm570, %v1018, 0
  %v1186 = vsel %vm570, %v1019, 0
  %v1189 = vsel %vm570, %v1020, 0
  %v1192 = vsel %vm570, %v1021, 0
  %v1195 = vsel %vm570, %v1022, 0
  %v1198 = vsel %vm570, %v1023, 0
  %v1201 = vsel %vm570, %v1024, 0
  %v1204 = vsel %vm570, %v1025, 0
  %v1207 = vsel %vm570, %v1026, 0
  %v1210 = vsel %vm570, %v1027, 0
  %v1213 = vsel %vm570, %v1028, 0
  %v1216 = vsel %vm570, %v1029, 0
  %v1219 = vsel %vm570, %v1030, 0
  %v1222 = vsel %vm570, %v1031, 0
  %v1225 = vsel %vm570, %v1032, 0
  %v1228 = vsel %vm570, %v1033, 0
  %v1231 = vsel %vm570, %v1034, 0
  %v1234 = vsel %vm570, %v1035, 0
  %1236 = vmatpush.msra.mxu0 0.0
  %1237 = vmatpush.msra.mxu0 0.0
  %1238 = vmatpush.msra.mxu0 0.0
  %1239 = vmatpush.msra.mxu0 0.0
  %1240 = vmatpush.msra.mxu0 0.0
  %1241 = vmatpush.msra.mxu0 0.0
  %1242 = vmatpush.msra.mxu0 0.0
  %1243 = vmatpush.msra.mxu0 0.0
  %1244 = vmatpush.msra.mxu0 0.0
  %1245 = vmatpush.msra.mxu0 0.0
  %1246 = vmatpush.msra.mxu0 0.0
  %1247 = vmatpush.msra.mxu0 0.0
  %1248 = vmatpush.msra.mxu0 %v1039
  %1249 = vmatpush.msra.mxu0 %v1038
  %1250 = vmatpush.msra.mxu0 %v1037
  %1251 = vmatpush.msra.mxu0 %v1036
  %1252 = vmatmul.f32.gmra.mxu0 %v1045
  %v1253 = vpop.f32.mrf.mxu0
  %v1254 = vadd.f32 %v1042, %v1253
  %1255 = vmatmul.f32.gmra.mxu0 %v1048
  %v1256 = vpop.f32.mrf.mxu0
  %v1257 = vadd.f32 %v1042, %v1256
  %1258 = vmatmul.f32.gmra.mxu0 %v1051
  %v1259 = vpop.f32.mrf.mxu0
  %v1260 = vadd.f32 %v1042, %v1259
  %1261 = vmatmul.f32.gmra.mxu0 %v1054
  %v1262 = vpop.f32.mrf.mxu0
  %v1263 = vadd.f32 %v1042, %v1262
  %1264 = vmatmul.f32.gmra.mxu0 %v1057
  %v1265 = vpop.f32.mrf.mxu0
  %v1266 = vadd.f32 %v1042, %v1265
  %1267 = vmatmul.f32.gmra.mxu0 %v1060
  %v1268 = vpop.f32.mrf.mxu0
  %v1269 = vadd.f32 %v1042, %v1268
  %1270 = vmatmul.f32.gmra.mxu0 %v1063
  %v1271 = vpop.f32.mrf.mxu0
  %v1272 = vadd.f32 %v1042, %v1271
  %1273 = vmatmul.f32.gmra.mxu0 %v1066
  %v1274 = vpop.f32.mrf.mxu0
  %v1275 = vadd.f32 %v1042, %v1274
  %1276 = vmatmul.f32.gmra.mxu0 %v1069
  %v1277 = vpop.f32.mrf.mxu0
  %v1278 = vadd.f32 %v1042, %v1277
  %1279 = vmatmul.f32.gmra.mxu0 %v1072
  %v1280 = vpop.f32.mrf.mxu0
  %v1281 = vadd.f32 %v1042, %v1280
  %1282 = vmatmul.f32.gmra.mxu0 %v1075
  %v1283 = vpop.f32.mrf.mxu0
  %v1284 = vadd.f32 %v1042, %v1283
  %1285 = vmatmul.f32.gmra.mxu0 %v1078
  %v1286 = vpop.f32.mrf.mxu0
  %v1287 = vadd.f32 %v1042, %v1286
  %1288 = vmatmul.f32.gmra.mxu0 %v1081
  %v1289 = vpop.f32.mrf.mxu0
  %v1290 = vadd.f32 %v1042, %v1289
  %1291 = vmatmul.f32.gmra.mxu0 %v1084
  %v1292 = vpop.f32.mrf.mxu0
  %v1293 = vadd.f32 %v1042, %v1292
  %1294 = vmatmul.f32.gmra.mxu0 %v1087
  %v1295 = vpop.f32.mrf.mxu0
  %v1296 = vadd.f32 %v1042, %v1295
  %1297 = vmatmul.f32.gmra.mxu0 %v1090
  %v1298 = vpop.f32.mrf.mxu0
  %v1299 = vadd.f32 %v1042, %v1298
  %1300 = vmatmul.f32.gmra.mxu0 %v1093
  %v1301 = vpop.f32.mrf.mxu0
  %v1302 = vadd.f32 %v1042, %v1301
  %1303 = vmatmul.f32.gmra.mxu0 %v1096
  %v1304 = vpop.f32.mrf.mxu0
  %v1305 = vadd.f32 %v1042, %v1304
  %1306 = vmatmul.f32.gmra.mxu0 %v1099
  %v1307 = vpop.f32.mrf.mxu0
  %v1308 = vadd.f32 %v1042, %v1307
  %1309 = vmatmul.f32.gmra.mxu0 %v1102
  %v1310 = vpop.f32.mrf.mxu0
  %v1311 = vadd.f32 %v1042, %v1310
  %1312 = vmatmul.f32.gmra.mxu0 %v1105
  %v1313 = vpop.f32.mrf.mxu0
  %v1314 = vadd.f32 %v1042, %v1313
  %1315 = vmatmul.f32.gmra.mxu0 %v1108
  %v1316 = vpop.f32.mrf.mxu0
  %v1317 = vadd.f32 %v1042, %v1316
  %1318 = vmatmul.f32.gmra.mxu0 %v1111
  %v1319 = vpop.f32.mrf.mxu0
  %v1320 = vadd.f32 %v1042, %v1319
  %1321 = vmatmul.f32.gmra.mxu0 %v1114
  %v1322 = vpop.f32.mrf.mxu0
  %v1323 = vadd.f32 %v1042, %v1322
  %1324 = vmatmul.f32.gmra.mxu0 %v1117
  %v1325 = vpop.f32.mrf.mxu0
  %v1326 = vadd.f32 %v1042, %v1325
  %1327 = vmatmul.f32.gmra.mxu0 %v1120
  %v1328 = vpop.f32.mrf.mxu0
  %v1329 = vadd.f32 %v1042, %v1328
  %1330 = vmatmul.f32.gmra.mxu0 %v1123
  %v1331 = vpop.f32.mrf.mxu0
  %v1332 = vadd.f32 %v1042, %v1331
  %1333 = vmatmul.f32.gmra.mxu0 %v1126
  %v1334 = vpop.f32.mrf.mxu0
  %v1335 = vadd.f32 %v1042, %v1334
  %1336 = vmatmul.f32.gmra.mxu0 %v1129
  %v1337 = vpop.f32.mrf.mxu0
  %v1338 = vadd.f32 %v1042, %v1337
  %1339 = vmatmul.f32.gmra.mxu0 %v1132
  %v1340 = vpop.f32.mrf.mxu0
  %v1341 = vadd.f32 %v1042, %v1340
  %1342 = vmatmul.f32.gmra.mxu0 %v1135
  %v1343 = vpop.f32.mrf.mxu0
  %v1344 = vadd.f32 %v1042, %v1343
  %1345 = vmatmul.f32.gmra.mxu0 %v1138
  %v1346 = vpop.f32.mrf.mxu0
  %v1347 = vadd.f32 %v1042, %v1346
  %1348 = vmatmul.f32.gmra.mxu0 %v1141
  %v1349 = vpop.f32.mrf.mxu0
  %v1350 = vadd.f32 %v1042, %v1349
  %1351 = vmatmul.f32.gmra.mxu0 %v1144
  %v1352 = vpop.f32.mrf.mxu0
  %v1353 = vadd.f32 %v1042, %v1352
  %1354 = vmatmul.f32.gmra.mxu0 %v1147
  %v1355 = vpop.f32.mrf.mxu0
  %v1356 = vadd.f32 %v1042, %v1355
  %1357 = vmatmul.f32.gmra.mxu0 %v1150
  %v1358 = vpop.f32.mrf.mxu0
  %v1359 = vadd.f32 %v1042, %v1358
  %1360 = vmatmul.f32.gmra.mxu0 %v1153
  %v1361 = vpop.f32.mrf.mxu0
  %v1362 = vadd.f32 %v1042, %v1361
  %1363 = vmatmul.f32.gmra.mxu0 %v1156
  %v1364 = vpop.f32.mrf.mxu0
  %v1365 = vadd.f32 %v1042, %v1364
  %1366 = vmatmul.f32.gmra.mxu0 %v1159
  %v1367 = vpop.f32.mrf.mxu0
  %v1368 = vadd.f32 %v1042, %v1367
  %1369 = vmatmul.f32.gmra.mxu0 %v1162
  %v1370 = vpop.f32.mrf.mxu0
  %v1371 = vadd.f32 %v1042, %v1370
  %1372 = vmatmul.f32.gmra.mxu0 %v1165
  %v1373 = vpop.f32.mrf.mxu0
  %v1374 = vadd.f32 %v1042, %v1373
  %1375 = vmatmul.f32.gmra.mxu0 %v1168
  %v1376 = vpop.f32.mrf.mxu0
  %v1377 = vadd.f32 %v1042, %v1376
  %1378 = vmatmul.f32.gmra.mxu0 %v1171
  %v1379 = vpop.f32.mrf.mxu0
  %v1380 = vadd.f32 %v1042, %v1379
  %1381 = vmatmul.f32.gmra.mxu0 %v1174
  %v1382 = vpop.f32.mrf.mxu0
  %v1383 = vadd.f32 %v1042, %v1382
  %1384 = vmatmul.f32.gmra.mxu0 %v1177
  %v1385 = vpop.f32.mrf.mxu0
  %v1386 = vadd.f32 %v1042, %v1385
  %1387 = vmatmul.f32.gmra.mxu0 %v1180
  %v1388 = vpop.f32.mrf.mxu0
  %v1389 = vadd.f32 %v1042, %v1388
  %1390 = vmatmul.f32.gmra.mxu0 %v1183
  %v1391 = vpop.f32.mrf.mxu0
  %v1392 = vadd.f32 %v1042, %v1391
  %1393 = vmatmul.f32.gmra.mxu0 %v1186
  %v1394 = vpop.f32.mrf.mxu0
  %v1395 = vadd.f32 %v1042, %v1394
  %1396 = vmatmul.f32.gmra.mxu0 %v1189
  %v1397 = vpop.f32.mrf.mxu0
  %v1398 = vadd.f32 %v1042, %v1397
  %1399 = vmatmul.f32.gmra.mxu0 %v1192
  %v1400 = vpop.f32.mrf.mxu0
  %v1401 = vadd.f32 %v1042, %v1400
  %1402 = vmatmul.f32.gmra.mxu0 %v1195
  %v1403 = vpop.f32.mrf.mxu0
  %v1404 = vadd.f32 %v1042, %v1403
  %1405 = vmatmul.f32.gmra.mxu0 %v1198
  %v1406 = vpop.f32.mrf.mxu0
  %v1407 = vadd.f32 %v1042, %v1406
  %1408 = vmatmul.f32.gmra.mxu0 %v1201
  %v1409 = vpop.f32.mrf.mxu0
  %v1410 = vadd.f32 %v1042, %v1409
  %1411 = vmatmul.f32.gmra.mxu0 %v1204
  %v1412 = vpop.f32.mrf.mxu0
  %v1413 = vadd.f32 %v1042, %v1412
  %1414 = vmatmul.f32.gmra.mxu0 %v1207
  %v1415 = vpop.f32.mrf.mxu0
  %v1416 = vadd.f32 %v1042, %v1415
  %1417 = vmatmul.f32.gmra.mxu0 %v1210
  %v1418 = vpop.f32.mrf.mxu0
  %v1419 = vadd.f32 %v1042, %v1418
  %1420 = vmatmul.f32.gmra.mxu0 %v1213
  %v1421 = vpop.f32.mrf.mxu0
  %v1422 = vadd.f32 %v1042, %v1421
  %1423 = vmatmul.f32.gmra.mxu0 %v1216
  %v1424 = vpop.f32.mrf.mxu0
  %v1425 = vadd.f32 %v1042, %v1424
  %1426 = vmatmul.f32.gmra.mxu0 %v1219
  %v1427 = vpop.f32.mrf.mxu0
  %v1428 = vadd.f32 %v1042, %v1427
  %1429 = vmatmul.f32.gmra.mxu0 %v1222
  %v1430 = vpop.f32.mrf.mxu0
  %v1431 = vadd.f32 %v1042, %v1430
  %1432 = vmatmul.f32.gmra.mxu0 %v1225
  %v1433 = vpop.f32.mrf.mxu0
  %v1434 = vadd.f32 %v1042, %v1433
  %1435 = vmatmul.f32.gmra.mxu0 %v1228
  %v1436 = vpop.f32.mrf.mxu0
  %v1437 = vadd.f32 %v1042, %v1436
  %1438 = vmatmul.f32.gmra.mxu0 %v1231
  %v1439 = vpop.f32.mrf.mxu0
  %v1440 = vadd.f32 %v1042, %v1439
  %1441 = vmatmul.f32.gmra.mxu0 %v1234
  %v1442 = vpop.f32.mrf.mxu0
  %v1443 = vadd.f32 %v1042, %v1442
  %1444 = vdwg.mxu0
  %vm1445 = vcmask 64512
  %1446 = vst.msk [vmem:[%s7] sm:$0xff] %vm1445, %v1254
  %1447 = vst.msk [vmem:[%s7 + $0x8] sm:$0xff] %vm1445, %v1257
  %1448 = vst.msk [vmem:[%s7 + $0x10] sm:$0xff] %vm1445, %v1260
  %1449 = vst.msk [vmem:[%s7 + $0x18] sm:$0xff] %vm1445, %v1263
  %1450 = vst.msk [vmem:[%s7 + $0x20] sm:$0xff] %vm1445, %v1266
  %1451 = vst.msk [vmem:[%s7 + $0x28] sm:$0xff] %vm1445, %v1269
  %1452 = vst.msk [vmem:[%s7 + $0x30] sm:$0xff] %vm1445, %v1272
  %1453 = vst.msk [vmem:[%s7 + $0x38] sm:$0xff] %vm1445, %v1275
  %1454 = vst.msk [vmem:[%s7 + $0x40] sm:$0xff] %vm1445, %v1278
  %1455 = vst.msk [vmem:[%s7 + $0x48] sm:$0xff] %vm1445, %v1281
  %1456 = vst.msk [vmem:[%s7 + $0x50] sm:$0xff] %vm1445, %v1284
  %1457 = vst.msk [vmem:[%s7 + $0x58] sm:$0xff] %vm1445, %v1287
  %1458 = vst.msk [vmem:[%s7 + $0x60] sm:$0xff] %vm1445, %v1290
  %1459 = vst.msk [vmem:[%s7 + $0x68] sm:$0xff] %vm1445, %v1293
  %1460 = vst.msk [vmem:[%s7 + $0x70] sm:$0xff] %vm1445, %v1296
  %1461 = vst.msk [vmem:[%s7 + $0x78] sm:$0xff] %vm1445, %v1299
  %1462 = vst.msk [vmem:[%s7 + $0x80] sm:$0xff] %vm1445, %v1302
  %1463 = vst.msk [vmem:[%s7 + $0x88] sm:$0xff] %vm1445, %v1305
  %1464 = vst.msk [vmem:[%s7 + $0x90] sm:$0xff] %vm1445, %v1308
  %1465 = vst.msk [vmem:[%s7 + $0x98] sm:$0xff] %vm1445, %v1311
  %1466 = vst.msk [vmem:[%s7 + $0xa0] sm:$0xff] %vm1445, %v1314
  %1467 = vst.msk [vmem:[%s7 + $0xa8] sm:$0xff] %vm1445, %v1317
  %1468 = vst.msk [vmem:[%s7 + $0xb0] sm:$0xff] %vm1445, %v1320
  %1469 = vst.msk [vmem:[%s7 + $0xb8] sm:$0xff] %vm1445, %v1323
  %1470 = vst.msk [vmem:[%s7 + $0xc0] sm:$0xff] %vm1445, %v1326
  %1471 = vst.msk [vmem:[%s7 + $0xc8] sm:$0xff] %vm1445, %v1329
  %1472 = vst.msk [vmem:[%s7 + $0xd0] sm:$0xff] %vm1445, %v1332
  %1473 = vst.msk [vmem:[%s7 + $0xd8] sm:$0xff] %vm1445, %v1335
  %1474 = vst.msk [vmem:[%s7 + $0xe0] sm:$0xff] %vm1445, %v1338
  %1475 = vst.msk [vmem:[%s7 + $0xe8] sm:$0xff] %vm1445, %v1341
  %1476 = vst.msk [vmem:[%s7 + $0xf0] sm:$0xff] %vm1445, %v1344
  %1477 = vst.msk [vmem:[%s7 + $0xf8] sm:$0xff] %vm1445, %v1347
  %1478 = vst.msk [vmem:[%s7 + $0x100] sm:$0xff] %vm1445, %v1350
  %1479 = vst.msk [vmem:[%s7 + $0x108] sm:$0xff] %vm1445, %v1353
  %1480 = vst.msk [vmem:[%s7 + $0x110] sm:$0xff] %vm1445, %v1356
  %1481 = vst.msk [vmem:[%s7 + $0x118] sm:$0xff] %vm1445, %v1359
  %1482 = vst.msk [vmem:[%s7 + $0x120] sm:$0xff] %vm1445, %v1362
  %1483 = vst.msk [vmem:[%s7 + $0x128] sm:$0xff] %vm1445, %v1365
  %1484 = vst.msk [vmem:[%s7 + $0x130] sm:$0xff] %vm1445, %v1368
  %1485 = vst.msk [vmem:[%s7 + $0x138] sm:$0xff] %vm1445, %v1371
  %1486 = vst.msk [vmem:[%s7 + $0x140] sm:$0xff] %vm1445, %v1374
  %1487 = vst.msk [vmem:[%s7 + $0x148] sm:$0xff] %vm1445, %v1377
  %1488 = vst.msk [vmem:[%s7 + $0x150] sm:$0xff] %vm1445, %v1380
  %1489 = vst.msk [vmem:[%s7 + $0x158] sm:$0xff] %vm1445, %v1383
  %1490 = vst.msk [vmem:[%s7 + $0x160] sm:$0xff] %vm1445, %v1386
  %1491 = vst.msk [vmem:[%s7 + $0x168] sm:$0xff] %vm1445, %v1389
  %1492 = vst.msk [vmem:[%s7 + $0x170] sm:$0xff] %vm1445, %v1392
  %1493 = vst.msk [vmem:[%s7 + $0x178] sm:$0xff] %vm1445, %v1395
  %1494 = vst.msk [vmem:[%s7 + $0x180] sm:$0xff] %vm1445, %v1398
  %1495 = vst.msk [vmem:[%s7 + $0x188] sm:$0xff] %vm1445, %v1401
  %1496 = vst.msk [vmem:[%s7 + $0x190] sm:$0xff] %vm1445, %v1404
  %1497 = vst.msk [vmem:[%s7 + $0x198] sm:$0xff] %vm1445, %v1407
  %1498 = vst.msk [vmem:[%s7 + $0x1a0] sm:$0xff] %vm1445, %v1410
  %1499 = vst.msk [vmem:[%s7 + $0x1a8] sm:$0xff] %vm1445, %v1413
  %1500 = vst.msk [vmem:[%s7 + $0x1b0] sm:$0xff] %vm1445, %v1416
  %1501 = vst.msk [vmem:[%s7 + $0x1b8] sm:$0xff] %vm1445, %v1419
  %1502 = vst.msk [vmem:[%s7 + $0x1c0] sm:$0xff] %vm1445, %v1422
  %1503 = vst.msk [vmem:[%s7 + $0x1c8] sm:$0xff] %vm1445, %v1425
  %1504 = vst.msk [vmem:[%s7 + $0x1d0] sm:$0xff] %vm1445, %v1428
  %1505 = vst.msk [vmem:[%s7 + $0x1d8] sm:$0xff] %vm1445, %v1431
  %1506 = vst.msk [vmem:[%s7 + $0x1e0] sm:$0xff] %vm1445, %v1434
  %1507 = vst.msk [vmem:[%s7 + $0x1e8] sm:$0xff] %vm1445, %v1437
  %1508 = vst.msk [vmem:[%s7 + $0x1f0] sm:$0xff] %vm1445, %v1440
  %1509 = vst.msk [vmem:[%s7 + $0x1f8] sm:$0xff] %vm1445, %v1443
  // Predicated region
  $region30: #{tpu_custom_call.1} parent=0 // pred_check
    _
  $region31: #{tpu_custom_call.1} parent=0 // pred_check_branch
    %1511 = sbr.rel (0) target = $region33
  $region32: #{tpu_custom_call.1} parent=0 // pred_region
    _
  $region33: #{tpu_custom_call.1} parent=0 // pred_fallthru
    _
  // Predicated region
  $region34: #{tpu_custom_call.1} parent=0 // pred_check
    _
  $region35: #{tpu_custom_call.1} parent=0 // pred_check_branch
    %1513 = sbr.rel (0) target = $region37
  $region36: #{tpu_custom_call.1} parent=0 // pred_region
    _
  $region37: #{tpu_custom_call.1} parent=0 // pred_fallthru
    _

</llo_original>
